<compile_context>
chip_gen: v7x
topology: tpu7x:2x2x1
jax: 0.10.0
libtpu: 0.0.40
codegen_flags: <defaults>
</compile_context>

<pallas_src>
import functools
import math

import jax
import jax.numpy as jnp
from jax.experimental import pallas as pl
from jax.experimental.pallas import tpu as pltpu


def _cdiv(a: int, b: int) -> int:
    return -(-a // b)


def _round_up(a: int, b: int) -> int:
    return _cdiv(a, b) * b


def _stats_kernel(
    x_ref, abs_out_ref, pos_out_ref, abs_acc_ref, pos_acc_ref,
    *, n_rows, row_tile, pack, tiles_per_split, needs_mask,
):
    s = pl.program_id(0)          # split index ("parallel": megacore on v7x)
    i = pl.program_id(1)          # tile index within the split ("arbitrary")

    @pl.when(i == 0)
    def _():
        abs_acc_ref[...] = jnp.zeros_like(abs_acc_ref)
        pos_acc_ref[...] = jnp.zeros_like(pos_acc_ref)

    abs_acc = abs_acc_ref[...]    # (pack, C) f32 running sum of |x|
    pos_acc = pos_acc_ref[...]    # (pack, C) f32 running count of (x > 0)

    if needs_mask:
        # Un-clamped global row offset of this tile.  (The index_map clamps the
        # DMA onto the last real tile; fully out-of-range tiles end up entirely
        # masked here, partial last tiles are masked past n_rows.)
        row_start = (s * tiles_per_split + i) * row_tile
        sub_iota = jax.lax.broadcasted_iota(
            jnp.int32, (pack, abs_acc.shape[-1]), 0)

    num_chunks = row_tile // pack
    for k in range(num_chunks):
        # Whole native sublane-tiles per chunk -> clean loads for any dtype.
        blk = x_ref[k * pack:(k + 1) * pack, :].astype(jnp.float32)
        if needs_mask:
            valid = (row_start + k * pack + sub_iota) < n_rows
            abs_acc = abs_acc + jnp.where(valid, jnp.abs(blk), 0.0)
            pos_acc = pos_acc + jnp.where(valid & (blk > 0.0), 1.0, 0.0)
        else:
            abs_acc = abs_acc + jnp.abs(blk)
            pos_acc = pos_acc + (blk > 0.0).astype(jnp.float32)

    abs_acc_ref[...] = abs_acc
    pos_acc_ref[...] = pos_acc

    @pl.when(i == pl.num_programs(1) - 1)
    def _():
        # Emit the raw per-split (pack, C) partial sums; the (tiny) cross-
        # sublane / cross-split combine is done in the JAX epilogue.
        abs_out_ref[0] = abs_acc
        pos_out_ref[0] = pos_acc


def activation_balancer_forward(
    x,                       # (..., C): channels on the last (lane) axis
    *,
    num_channels,
    min_positive=0.05,
    max_positive=0.95,
    max_factor=0.04,
    sign_gain_factor=0.01,
    scale_gain_factor=0.02,
    min_abs=0.2,
    max_abs=100.0,
    min_prob=0.1,
    count=0,
    row_tile=None,
    num_splits=None,
):
    assert x.shape[-1] == num_channels, "channel_dim must be the last axis"
    C = num_channels
    N = math.prod(x.shape[:-1])
    x2 = x.reshape(N, C)

    # TODO(synk): the PyTorch module applies the balancer only with probability
    # `prob` (random.random()) and tracks cpu_count / the `count` buffer; here
    # the deterministic count=0 path is used (prob = 0.5), which leaves the
    # forward output identical either way.
    prob = max(min_prob, 0.5 ** (1 + count / 4000.0))
    sign_gain = sign_gain_factor / prob
    scale_gain = scale_gain_factor / prob

    itemsize = jnp.dtype(x.dtype).itemsize
    # Sublane packing of the input dtype: f32 -> 8, bf16/f16 -> 16, int8 -> 32.
    pack = 8 * max(1, 4 // itemsize)

    if row_tile is None:
        # ~2 MiB per input block (Pallas double-buffers it), capped at 128
        # vreg-rows of unrolled accumulation, never larger than the (padded)
        # input itself.  Fits comfortably inside the scoped VMEM default on
        # v5e/v6e (128 MiB) and v7x (64 MiB).
        target_bytes = 2 * 1024 * 1024
        row_tile = max(pack, target_bytes // max(1, C * itemsize))
        row_tile = min(row_tile, pack * 128)
        row_tile = min(row_tile, _round_up(N, pack))
        row_tile = max(pack, (row_tile // pack) * pack)
    assert row_tile % pack == 0, "row_tile must be a multiple of the sublane pack"

    n_tiles = _cdiv(N, row_tile)
    if num_splits is None:
        # Leading "parallel" axis: shards the reduction across TensorCores on
        # v7x (2 TC/chip); negligible sequential overhead on v5e/v6e.
        num_splits = 2 if n_tiles >= 4 else 1
    tiles_per_split = _cdiv(n_tiles, num_splits)
    needs_mask = (num_splits * tiles_per_split * row_tile) != N

    def x_index_map(s, i):
        t = s * tiles_per_split + i
        # Clamp fully-out-of-range tiles onto the last real tile; their rows
        # are masked out inside the kernel, so re-reading it is harmless.
        return (jnp.minimum(t, n_tiles - 1), 0)

    kernel = functools.partial(
        _stats_kernel,
        n_rows=N,
        row_tile=row_tile,
        pack=pack,
        tiles_per_split=tiles_per_split,
        needs_mask=needs_mask,
    )

    abs_partial, pos_partial = pl.pallas_call(
        kernel,
        out_shape=(
            jax.ShapeDtypeStruct((num_splits, pack, C), jnp.float32),
            jax.ShapeDtypeStruct((num_splits, pack, C), jnp.float32),
        ),
        grid_spec=pltpu.PrefetchScalarGridSpec(
            num_scalar_prefetch=0,
            grid=(num_splits, tiles_per_split),
            in_specs=[
                pl.BlockSpec((row_tile, C), x_index_map),
            ],
            out_specs=[
                pl.BlockSpec((1, pack, C), lambda s, i: (s, 0, 0)),
                pl.BlockSpec((1, pack, C), lambda s, i: (s, 0, 0)),
            ],
            scratch_shapes=[
                pltpu.VMEM((pack, C), jnp.float32),   # running sum of |x|
                pltpu.VMEM((pack, C), jnp.float32),   # running count of x > 0
            ],
        ),
        compiler_params=pltpu.CompilerParams(
            dimension_semantics=("parallel", "arbitrary"),
        ),
        cost_estimate=pl.CostEstimate(
            flops=3 * N * C,
            transcendentals=0,
            bytes_accessed=N * C * itemsize + 2 * num_splits * pack * C * 4,
        ),
    )(x2)

    # O(C) epilogue in plain JAX: combine per-split / per-sublane partial sums
    # and apply the clamp formulas (exact float32 math, negligible cost).
    inv_n = 1.0 / float(N)
    x_abs_mean = jnp.sum(abs_partial, axis=(0, 1)) * inv_n   # (C,) float32
    prop_pos = jnp.sum(pos_partial, axis=(0, 1)) * inv_n     # (C,) float32

    # ---- _compute_scale_factor ----
    if min_abs == 0.0:
        below = jnp.zeros_like(x_abs_mean)
    else:
        below = jnp.clip((min_abs - x_abs_mean) * (scale_gain / min_abs),
                         0.0, max_factor)
    above = jnp.clip((x_abs_mean - max_abs) * (scale_gain / max_abs),
                     0.0, max_factor)
    scale_factor = below - above

    # ---- _compute_sign_factor ----
    if min_positive == 0.0:
        f1 = jnp.zeros_like(prop_pos)
    else:
        f1 = jnp.clip((min_positive - prop_pos) * (sign_gain / min_positive),
                      0.0, max_factor)
    if max_positive == 1.0:
        f2 = jnp.zeros_like(prop_pos)
    else:
        f2 = jnp.clip((prop_pos - max_positive)
                      * (sign_gain / (1.0 - max_positive)),
                      0.0, max_factor)
    sign_factor = f1 - f2

    # Forward output of ActivationBalancerFunction is x itself, unchanged;
    # we do NOT copy it through the kernel (that would double HBM traffic).
    return x, scale_factor, sign_factor


def _reference(x, *, min_positive, max_positive, max_factor,
               sign_gain, scale_gain, min_abs, max_abs):
    xf = x.astype(jnp.float32)
    axes = tuple(range(x.ndim - 1))
    x_abs_mean = jnp.mean(jnp.abs(xf), axis=axes)
    prop_pos = jnp.mean((xf > 0).astype(jnp.float32), axis=axes)
    below = jnp.clip((min_abs - x_abs_mean) * (scale_gain / min_abs),
                     0.0, max_factor)
    above = jnp.clip((x_abs_mean - max_abs) * (scale_gain / max_abs),
                     0.0, max_factor)
    scale_factor = below - above
    f1 = jnp.clip((min_positive - prop_pos) * (sign_gain / min_positive),
                  0.0, max_factor)
    f2 = jnp.clip((prop_pos - max_positive) * (sign_gain / (1.0 - max_positive)),
                  0.0, max_factor)
    sign_factor = f1 - f2
    return x, scale_factor, sign_factor


if __name__ == "__main__":
    prob = max(0.1, 0.5 ** (1 + 0 / 4000.0))

    # Test 1: module defaults, (batch=2, seq=8, hidden/channels=32), chan_dim=-1.
    key = jax.random.PRNGKey(0)
    B, T, C = 2, 8, 32
    x = jax.random.normal(key, (B, T, C), dtype=jnp.float32)
    x_out, scale_f, sign_f = activation_balancer_forward(x, num_channels=C)
    jax.block_until_ready((x_out, scale_f, sign_f))

    _, scale_r, sign_r = _reference(
        x, min_positive=0.05, max_positive=0.95, max_factor=0.04,
        sign_gain=0.01 / prob, scale_gain=0.02 / prob,
        min_abs=0.2, max_abs=100.0)
    assert x_out is x, "forward must return x unchanged (no copy)"
    assert jnp.allclose(scale_f, scale_r, atol=1e-6), "scale_factor mismatch"
    assert jnp.allclose(sign_f, sign_r, atol=1e-6), "sign_factor mismatch"

    # Test 2: thresholds that make the clamps active and channel-dependent,
    # ragged row count (21) + forced 2-way split with tiny tiles, exercising
    # the masking / clamped-tile / multi-split partial-sum paths.
    x2 = jax.random.normal(jax.random.PRNGKey(0), (3, 7, 160), dtype=jnp.float32)
    kw = dict(min_positive=0.9, max_positive=0.95, max_factor=0.04,
              min_abs=2.0, max_abs=100.0)
    _, scale_f2, sign_f2 = activation_balancer_forward(
        x2, num_channels=160, row_tile=8, num_splits=2,
        sign_gain_factor=0.01, scale_gain_factor=0.02, **kw)
    jax.block_until_ready((scale_f2, sign_f2))
    _, scale_r2, sign_r2 = _reference(
        x2, sign_gain=0.01 / prob, scale_gain=0.02 / prob, **kw)
    assert jnp.allclose(scale_f2, scale_r2, atol=1e-5), "scale_factor mismatch (2)"
    assert jnp.allclose(sign_f2, sign_r2, atol=1e-5), "sign_factor mismatch (2)"

    print("KERNEL_OK")
</pallas_src>

<mosaic_0001>
module attributes {stable_mosaic.version = 11 : i64} {
  func.func @_stats_kernel(%arg0: i32, %arg1: i32, %arg2: memref<16x32xf32, #tpu.memory_space<vmem>>, %arg3: memref<1x8x32xf32, #tpu.memory_space<vmem>>, %arg4: memref<1x8x32xf32, #tpu.memory_space<vmem>>, %arg5: memref<8x32xf32, #tpu.memory_space<vmem>>, %arg6: memref<8x32xf32, #tpu.memory_space<vmem>>) attributes {dimension_semantics = [#tpu.dimension_semantics<parallel>, #tpu.dimension_semantics<arbitrary>], iteration_bounds = array<i64: 1, 1>, scalar_prefetch = 0 : i64, scratch_operands = 2 : i64, tpu.core_type = #tpu.core_type<tc>, window_params = [{transform_indices = @transform_0, window_bounds = array<i64: 16, 32>}, {transform_indices = @transform_1, window_bounds = array<i64: 1, 8, 32>}, {transform_indices = @transform_2, window_bounds = array<i64: 1, 8, 32>}]} {
    %c0_i32 = arith.constant 0 : i32
    %0 = arith.cmpi eq, %arg1, %c0_i32 : i32
    %1 = arith.extui %0 : i1 to i32
    %c0_i32_0 = arith.constant 0 : i32
    %2 = arith.cmpi ne, %1, %c0_i32_0 : i32
    scf.if %2 {
      %cst_14 = arith.constant 0.000000e+00 : f32
      %26 = vector.broadcast %cst_14 : f32 to vector<8x32xf32>
      %c0_15 = arith.constant 0 : index
      %c0_16 = arith.constant 0 : index
      %27 = vector.load %arg5[%c0_15, %c0_16] : memref<8x32xf32, #tpu.memory_space<vmem>>, vector<8x32xf32>
      tpu.vector_store %arg5[%c0_15, %c0_16], %26 {strides = array<i32>} : memref<8x32xf32, #tpu.memory_space<vmem>>, vector<8x32xf32>,
      %cst_17 = arith.constant 0.000000e+00 : f32
      %28 = vector.broadcast %cst_17 : f32 to vector<8x32xf32>
      %c0_18 = arith.constant 0 : index
      %c0_19 = arith.constant 0 : index
      %29 = vector.load %arg6[%c0_18, %c0_19] : memref<8x32xf32, #tpu.memory_space<vmem>>, vector<8x32xf32>
      tpu.vector_store %arg6[%c0_18, %c0_19], %28 {strides = array<i32>} : memref<8x32xf32, #tpu.memory_space<vmem>>, vector<8x32xf32>,
    } else {
    }
    %c0 = arith.constant 0 : index
    %c0_1 = arith.constant 0 : index
    %3 = vector.load %arg5[%c0, %c0_1] : memref<8x32xf32, #tpu.memory_space<vmem>>, vector<8x32xf32>
    %c0_2 = arith.constant 0 : index
    %c0_3 = arith.constant 0 : index
    %4 = vector.load %arg6[%c0_2, %c0_3] : memref<8x32xf32, #tpu.memory_space<vmem>>, vector<8x32xf32>
    %c0_4 = arith.constant 0 : index
    %c0_5 = arith.constant 0 : index
    %5 = vector.load %arg2[%c0_4, %c0_5] : memref<16x32xf32, #tpu.memory_space<vmem>>, vector<8x32xf32>
    %6 = math.absf %5 : vector<8x32xf32>
    %7 = arith.addf %3, %6 : vector<8x32xf32>
    %cst = arith.constant 0.000000e+00 : f32
    %8 = vector.broadcast %cst : f32 to vector<8x32xf32>
    %9 = arith.cmpf ogt, %5, %8 : vector<8x32xf32>
    %10 = arith.extui %9 : vector<8x32xi1> to vector<8x32xi32>
    %11 = arith.sitofp %10 : vector<8x32xi32> to vector<8x32xf32>
    %12 = arith.addf %4, %11 : vector<8x32xf32>
    %c8 = arith.constant 8 : index
    %c0_6 = arith.constant 0 : index
    %13 = vector.load %arg2[%c8, %c0_6] : memref<16x32xf32, #tpu.memory_space<vmem>>, vector<8x32xf32>
    %14 = math.absf %13 : vector<8x32xf32>
    %15 = arith.addf %7, %14 : vector<8x32xf32>
    %cst_7 = arith.constant 0.000000e+00 : f32
    %16 = vector.broadcast %cst_7 : f32 to vector<8x32xf32>
    %17 = arith.cmpf ogt, %13, %16 : vector<8x32xf32>
    %18 = arith.extui %17 : vector<8x32xi1> to vector<8x32xi32>
    %19 = arith.sitofp %18 : vector<8x32xi32> to vector<8x32xf32>
    %20 = arith.addf %12, %19 : vector<8x32xf32>
    %c0_8 = arith.constant 0 : index
    %c0_9 = arith.constant 0 : index
    %21 = vector.load %arg5[%c0_8, %c0_9] : memref<8x32xf32, #tpu.memory_space<vmem>>, vector<8x32xf32>
    tpu.vector_store %arg5[%c0_8, %c0_9], %15 {strides = array<i32>} : memref<8x32xf32, #tpu.memory_space<vmem>>, vector<8x32xf32>,
    %c0_10 = arith.constant 0 : index
    %c0_11 = arith.constant 0 : index
    %22 = vector.load %arg6[%c0_10, %c0_11] : memref<8x32xf32, #tpu.memory_space<vmem>>, vector<8x32xf32>
    tpu.vector_store %arg6[%c0_10, %c0_11], %20 {strides = array<i32>} : memref<8x32xf32, #tpu.memory_space<vmem>>, vector<8x32xf32>,
    %c0_i32_12 = arith.constant 0 : i32
    %23 = arith.cmpi eq, %arg1, %c0_i32_12 : i32
    %24 = arith.extui %23 : i1 to i32
    %c0_i32_13 = arith.constant 0 : i32
    %25 = arith.cmpi ne, %24, %c0_i32_13 : i32
    scf.if %25 {
      %c0_14 = arith.constant 0 : index
      %c0_15 = arith.constant 0 : index
      %c0_16 = arith.constant 0 : index
      %26 = vector.load %arg3[%c0_14, %c0_15, %c0_16] : memref<1x8x32xf32, #tpu.memory_space<vmem>>, vector<1x8x32xf32>
      %27 = vector.shape_cast %26 : vector<1x8x32xf32> to vector<8x32xf32>
      %28 = vector.shape_cast %15 : vector<8x32xf32> to vector<1x8x32xf32>
      tpu.vector_store %arg3[%c0_14, %c0_15, %c0_16], %28 {strides = array<i32>} : memref<1x8x32xf32, #tpu.memory_space<vmem>>, vector<1x8x32xf32>,
      %c0_17 = arith.constant 0 : index
      %c0_18 = arith.constant 0 : index
      %c0_19 = arith.constant 0 : index
      %29 = vector.load %arg4[%c0_17, %c0_18, %c0_19] : memref<1x8x32xf32, #tpu.memory_space<vmem>>, vector<1x8x32xf32>
      %30 = vector.shape_cast %29 : vector<1x8x32xf32> to vector<8x32xf32>
      %31 = vector.shape_cast %20 : vector<8x32xf32> to vector<1x8x32xf32>
      tpu.vector_store %arg4[%c0_17, %c0_18, %c0_19], %31 {strides = array<i32>} : memref<1x8x32xf32, #tpu.memory_space<vmem>>, vector<1x8x32xf32>,
    } else {
    }
    return
  }
  func.func @transform_0(%arg0: i32, %arg1: i32) -> (i32, i32) {
    %c1_i32 = arith.constant 1 : i32
    %0 = arith.muli %arg0, %c1_i32 : i32
    %1 = arith.addi %0, %arg1 : i32
    %c0_i32 = arith.constant 0 : i32
    %2 = arith.minsi %1, %c0_i32 : i32
    %c0_i32_0 = arith.constant 0 : i32
    %c0_i32_1 = arith.constant 0 : i32
    return %2, %c0_i32_0 : i32, i32
  }
  func.func @transform_1(%arg0: i32, %arg1: i32) -> (i32, i32, i32) {
    %c0_i32 = arith.constant 0 : i32
    %c0_i32_0 = arith.constant 0 : i32
    %c0_i32_1 = arith.constant 0 : i32
    return %arg0, %c0_i32, %c0_i32_0 : i32, i32, i32
  }
  func.func @transform_2(%arg0: i32, %arg1: i32) -> (i32, i32, i32) {
    %c0_i32 = arith.constant 0 : i32
    %c0_i32_0 = arith.constant 0 : i32
    %c0_i32_1 = arith.constant 0 : i32
    return %arg0, %c0_i32, %c0_i32_0 : i32, i32, i32
  }
}

</mosaic_0001>

<llo_original>
// kernel: tpu_custom_call.1
$region0: #{tpu_custom_call.1}
  #allocation0 [shape = 'u32[]', space=smem, size = 0x4, offset = 0x4, fixed_abs, tag = 'smem constant byte address 0x4 - core index']
  #allocation1 [shape = 'u32[144,128]{1,0:T(1,128)}', space=vmem, size = 0x12000, scoped, tag = 'internal scratch']
  #allocation2 [shape = 'f32[8,32]{1,0:T(8,128)}', space=vmem, size = 0x1000, scoped, tag = 'scratch operand']
  #allocation3 [shape = 'f32[8,32]{1,0:T(8,128)}', space=vmem, size = 0x1000, scoped, tag = 'scratch operand']
  %s0 = inlined_call_operand.hbm [shape: f32[16,32], index: 0, kind: input, shape index: {}]
  %s1 = inlined_call_operand.hbm [shape: f32[1,8,32], index: 1, kind: output, shape index: {0}]
  %s2 = inlined_call_operand.hbm [shape: f32[1,8,32], index: 2, kind: output, shape index: {1}]
  %3 = xla_tuple %s1, %s2
  %s4 = sld [smem:[#allocation0]]
  $region34: #{tpu_custom_call.1} parent=0
    _
  %s6 = ssub.s32 1, %s4
  %s7 = scalar_select 0, %s6, %s4
  $region1: #{tpu_custom_call.1} parent=0
    #allocation4 [shape = 'u8[8192]{0}', space=vmem, size = 0x2000, scoped, tag = 'input window, operand 0, single buffered']
    #allocation5 [shape = 's32[1]{0}', space=sflag, size = 0x4, scoped, tag = 'scoped memory for tpu_custom_call.1']
    #allocation6 [shape = 's32[1]{0}', space=sflag, size = 0x4, scoped, tag = 'scoped memory for tpu_custom_call.1']
    #allocation7 [shape = 'u8[4096]{0}', space=vmem, size = 0x1000, scoped, tag = 'output window, operand 0, single buffered']
    #allocation8 [shape = 'u8[4096]{0}', space=vmem, size = 0x1000, scoped, tag = 'output window, operand 1, single buffered']
    #allocation9 [shape = 's32[1]{0}', space=sflag, size = 0x4, scoped, tag = 'scoped memory for tpu_custom_call.1']
    %8 = vsyncpa [#allocation5], 0
    %9 = vsyncpa [#allocation6], 0
    %10 = vsyncpa [#allocation9], 0
    // Predicated region
    $region2: #{tpu_custom_call.1} parent=1 // pred_check
      _
    $region3: #{tpu_custom_call.1} parent=1 // pred_check_branch
      %12 = sbr.rel (0) target = $region5
    $region4: #{tpu_custom_call.1} parent=1 // pred_region
      %s13 = sadd.s32 0, 0
      %p14 = scmp.lt.s32.totalorder %s13, 0
      %s15 = scalar_select %p14, %s13, 0
      %s16 = smul.u32 2, %s15
      %s18 = ssub.s32 256, 256
      %19 = vsyncadd [#allocation5], %s18
      %s20 = smul.addr %s16, 128
      %s21 = scalar_lea.hbm %s0, %s20
      %s22 = sshll.u32 [#allocation4], 4
      %s23 = int_to_ptr.vmem [resolvable:$true] %s22
      %28 = dma.hbm_to_vmem [thread:$0]  %s21, 256, %s23, [#allocation5], 128, 128, 8
    $region5: #{tpu_custom_call.1} parent=1 // pred_fallthru
      _
    // Predicated region
    $region6: #{tpu_custom_call.1} parent=1 // pred_check
      _
    $region7: #{tpu_custom_call.1} parent=1 // pred_check_branch
      %30 = sbr.rel (0) target = $region9
    $region8: #{tpu_custom_call.1} parent=1 // pred_region
      %31 = dma.done [#allocation5], 256
    $region9: #{tpu_custom_call.1} parent=1 // pred_fallthru
      _
    %s32 = sadd.s32 0, 0
    %p33 = scmp.lt.s32.totalorder %s32, 0
    %s34 = scalar_select %p33, %s32, 0
    %s35 = smul.u32 2, %s34
    %p36 = scmp.eq.s32.totalorder 0, 0
    // Predicated region
    $region10: #{tpu_custom_call.1} parent=1 // pred_check
      %p37 = pneg %p36
    $region11: #{tpu_custom_call.1} parent=1 // pred_check_branch
      %39 = sbr.rel (%p37) target = $region13
    $region12: #{tpu_custom_call.1} parent=1 // pred_region
      %vm40 = vcmask 261120
      %41 = vst.msk [vmem:[#allocation2] sm:$0xff] %vm40, 0.0
      %42 = vst.msk [vmem:[#allocation3] sm:$0xff] %vm40, 0.0
    $region13: #{tpu_custom_call.1} parent=1 // pred_fallthru
      _
    %v43 = vld [vmem:[#allocation2] sm:$0xff]
    %v44 = vld [vmem:[#allocation3] sm:$0xff]
    %v45 = vld [vmem:[#allocation4] sm:$0xff]
    %v46 = vand.u32 2147483647, %v45
    %v47 = vadd.f32 %v43, %v46
    %vm48 = vcmp.gt.f32.partialorder %v45, 0.0
    %v49 = vsel %vm48, 1, 0
    %v50 = vcvt.s32.f32 %v49
    %v51 = vadd.f32 %v44, %v50
    %v52 = vld [vmem:[#allocation4 + $0x8] sm:$0xff]
    %v53 = vand.u32 2147483647, %v52
    %v54 = vadd.f32 %v47, %v53
    %vm55 = vcmp.gt.f32.partialorder %v52, 0.0
    %v56 = vsel %vm55, 1, 0
    %v57 = vcvt.s32.f32 %v56
    %v58 = vadd.f32 %v51, %v57
    %vm59 = vcmask 261120
    %60 = vst.msk [vmem:[#allocation2] sm:$0xff] %vm59, %v54
    %61 = vst.msk [vmem:[#allocation3] sm:$0xff] %vm59, %v58
    // Predicated region
    $region14: #{tpu_custom_call.1} parent=1 // pred_check
      %p62 = pneg %p36
    $region15: #{tpu_custom_call.1} parent=1 // pred_check_branch
      %64 = sbr.rel (%p62) target = $region17
    $region16: #{tpu_custom_call.1} parent=1 // pred_region
      %65 = vst.msk [vmem:[#allocation7] sm:$0xff] %vm59, %v54
      %66 = vst.msk [vmem:[#allocation8] sm:$0xff] %vm59, %v58
    $region17: #{tpu_custom_call.1} parent=1 // pred_fallthru
      _
    // Predicated region
    $region18: #{tpu_custom_call.1} parent=1 // pred_check
      _
    $region19: #{tpu_custom_call.1} parent=1 // pred_check_branch
      %68 = sbr.rel (0) target = $region21
    $region20: #{tpu_custom_call.1} parent=1 // pred_region
      %s70 = ssub.s32 128, 128
      %71 = vsyncadd [#allocation6], %s70
      %s73 = sshll.u32 [#allocation7], 4
      %s74 = int_to_ptr.vmem [resolvable:$true] %s73
      %76 = dma.vmem_to_hbm [thread:$0]  %s74, 128, %s1, [#allocation6]
    $region21: #{tpu_custom_call.1} parent=1 // pred_fallthru
      _
    // Predicated region
    $region22: #{tpu_custom_call.1} parent=1 // pred_check
      _
    $region23: #{tpu_custom_call.1} parent=1 // pred_check_branch
      %78 = sbr.rel (0) target = $region25
    $region24: #{tpu_custom_call.1} parent=1 // pred_region
      %s80 = ssub.s32 128, 128
      %81 = vsyncadd [#allocation9], %s80
      %s83 = sshll.u32 [#allocation8], 4
      %s84 = int_to_ptr.vmem [resolvable:$true] %s83
      %86 = dma.vmem_to_hbm [thread:$0]  %s84, 128, %s2, [#allocation9]
    $region25: #{tpu_custom_call.1} parent=1 // pred_fallthru
      _
    // Predicated region
    $region26: #{tpu_custom_call.1} parent=1 // pred_check
      _
    $region27: #{tpu_custom_call.1} parent=1 // pred_check_branch
      %88 = sbr.rel (0) target = $region29
    $region28: #{tpu_custom_call.1} parent=1 // pred_region
      %89 = dma.done [#allocation6], 128
    $region29: #{tpu_custom_call.1} parent=1 // pred_fallthru
      _
    // Predicated region
    $region30: #{tpu_custom_call.1} parent=1 // pred_check
      _
    $region31: #{tpu_custom_call.1} parent=1 // pred_check_branch
      %91 = sbr.rel (0) target = $region33
    $region32: #{tpu_custom_call.1} parent=1 // pred_region
      %92 = dma.done [#allocation9], 128
    $region33: #{tpu_custom_call.1} parent=1 // pred_fallthru
      _
    %93 = vsyncpa [#allocation5], 1
    %94 = vsyncpa [#allocation6], 1
    %95 = vsyncpa [#allocation9], 1

</llo_original>
